<compile_context>
chip_gen: v5e
topology: v5e:2x2
jax: 0.10.0
libtpu: 0.0.40
codegen_flags: <defaults>
</compile_context>

<pallas_src>
import numpy as np
import jax
import jax.numpy as jnp
from jax.experimental import pallas as pl
from jax.experimental.pallas import tpu as pltpu

# ----------------------------------------------------------------------------
# Host-side constants: DCT basis + libjpeg quantization tables.
# ----------------------------------------------------------------------------

_LUMA_QTABLE = np.array(
    [[16, 11, 10, 16, 24, 40, 51, 61],
     [12, 12, 14, 19, 26, 58, 60, 55],
     [14, 13, 16, 24, 40, 57, 69, 56],
     [14, 17, 22, 29, 51, 87, 80, 62],
     [18, 22, 37, 56, 68, 109, 103, 77],
     [24, 35, 55, 64, 81, 104, 113, 92],
     [49, 64, 78, 87, 103, 121, 120, 101],
     [72, 92, 95, 98, 112, 100, 103, 99]], dtype=np.float64)

_CHROMA_QTABLE = np.array(
    [[17, 18, 24, 47, 99, 99, 99, 99],
     [18, 21, 26, 66, 99, 99, 99, 99],
     [24, 26, 56, 99, 99, 99, 99, 99],
     [47, 66, 99, 99, 99, 99, 99, 99],
     [99, 99, 99, 99, 99, 99, 99, 99],
     [99, 99, 99, 99, 99, 99, 99, 99],
     [99, 99, 99, 99, 99, 99, 99, 99],
     [99, 99, 99, 99, 99, 99, 99, 99]], dtype=np.float64)


def _scaled_qtable(base, quality):
    quality = int(np.clip(quality, 1, 100))
    if quality < 50:
        scale = 5000 // quality
    else:
        scale = 200 - quality * 2
    q = np.floor((base * scale + 50) / 100)
    return np.clip(q, 1, 255).astype(np.float32)


def _dct8_matrix():
    # D[u, i] = c(u) * cos((2i+1) u pi / 16)   (orthonormal; matches JPEG's
    # quantization convention exactly).
    u = np.arange(8)[:, None]
    i = np.arange(8)[None, :]
    d = np.cos((2 * i + 1) * u * np.pi / 16.0)
    d[0, :] *= np.sqrt(1.0 / 8.0)
    d[1:, :] *= np.sqrt(2.0 / 8.0)
    return d.astype(np.float32)


def _pick_tile(d):
    """Largest multiple-of-8 divisor of d that is <= 128 (full d if d <= 128)."""
    if d <= 128:
        return d
    for t in range(128, 7, -8):
        if d % t == 0:
            return t
    return 8


def _pick_batch_block(n, tile_h, tile_w, n_spatial_steps):
    """Images per grid step.

    VMEM per image per step ~= in+out blocks (double-buffered, 4x) plus about
    7 live f32/bf16 intermediate slabs of the (3, tile_h, tile_w) block.
    Also cap bsz so the grid keeps >= ~4 steps (2-core sharding + pipeline
    amortization on v7x).
    """
    per_img = 3 * tile_h * tile_w * 4 * 11
    budget = 20 * 1024 * 1024
    max_b = int(max(1, min(n, 8, budget // per_img)))
    while max_b > 1 and (n // max_b) * n_spatial_steps < 4:
        max_b -= 1
    for b in range(max_b, 0, -1):
        if n % b == 0:
            return b
    return 1


# ----------------------------------------------------------------------------
# Kernel: one (bsz images x 3 channels x TILE_H x TILE_W) block per grid step.
# ----------------------------------------------------------------------------

def _jpeg_kernel(x_ref, dh_ref, dht_ref, dw_ref, dwt_ref, q_ref, qinv_ref,
                 o_ref):
    bsz, _, th, tw = x_ref.shape
    b3 = bsz * 3

    # ---- elementwise pre-processing on the whole (bsz, 3, th, tw) slab -----
    # forward() pre-processing + ToPILImage byte truncation, fused:
    # floor(clip(255 * clip((x+1)/2, 0, 1))) == floor(clip(127.5x+127.5, 0, 255))
    x = x_ref[...]
    p255 = jnp.floor(jnp.clip(x * 127.5 + 127.5, 0.0, 255.0))
    r, g, b = p255[:, 0], p255[:, 1], p255[:, 2]

    # RGB -> level-shifted YCbCr (JPEG full range); the +/-128 chroma offsets
    # cancel through the DCT, the luma -128 level shift is folded in here.
    y = 0.299 * r + 0.587 * g + 0.114 * b - 128.0
    cb = -0.168736 * r - 0.331264 * g + 0.5 * b
    cr = 0.5 * r - 0.418688 * g - 0.081312 * b
    planes = jnp.stack([y, cb, cr], axis=1)            # (bsz, 3, th, tw) f32

    dh = jnp.broadcast_to(dh_ref[...], (b3, th, th))   # bf16 block-diag DCT
    dht = jnp.broadcast_to(dht_ref[...], (b3, th, th))
    dw = dw_ref[...]                                   # (tw, tw) bf16
    dwt = dwt_ref[...]

    # ---- forward 2-D DCT: one big column matmul + one batched row matmul ---
    pb = planes.reshape(b3 * th, tw).astype(jnp.bfloat16)
    t = jnp.dot(pb, dwt, preferred_element_type=jnp.float32)      # column pass
    t = t.reshape(b3, th, tw).astype(jnp.bfloat16)
    coeff = jnp.einsum('bhk,bkw->bhw', dh, t,
                       preferred_element_type=jnp.float32)        # row pass
    coeff = coeff.reshape(bsz, 3, th, tw)

    # ---- quantize / dequantize (reciprocal table -> multiply, no divide) ---
    # floor(v + 0.5) == round-to-nearest except exact negative .5 ties.
    qc = jnp.floor(coeff * qinv_ref[...] + 0.5) * q_ref[...]

    # ---- inverse 2-D DCT ---------------------------------------------------
    qb = qc.reshape(b3, th, tw).astype(jnp.bfloat16)
    t2 = jnp.einsum('bhk,bkw->bhw', dht, qb,
                    preferred_element_type=jnp.float32)
    t2 = t2.reshape(b3 * th, tw).astype(jnp.bfloat16)
    rec = jnp.dot(t2, dw, preferred_element_type=jnp.float32)
    rec = rec.reshape(bsz, 3, th, tw)

    # ---- YCbCr -> RGB, uint8 clamp, ToTensor /255 and 2x-1 fused -----------
    yy, cbq, crq = rec[:, 0], rec[:, 1], rec[:, 2]
    rr = yy + 1.402 * crq + 128.0
    gg = yy - 0.344136 * cbq - 0.714136 * crq + 128.0
    bb = yy + 1.772 * cbq + 128.0
    rgb = jnp.stack([rr, gg, bb], axis=1)              # (bsz, 3, th, tw)
    out = jnp.clip(jnp.floor(rgb + 0.5), 0.0, 255.0) * (2.0 / 255.0) - 1.0
    o_ref[...] = out.astype(o_ref.dtype)


# ----------------------------------------------------------------------------
# Wrapper
# ----------------------------------------------------------------------------

def jpeg_noise(x, quality=50):
    """x: (N, 3, H, W) float32 in [-1, 1]; H, W multiples of 8."""
    n, c, h, w = x.shape
    assert c == 3 and h % 8 == 0 and w % 8 == 0

    tile_h = _pick_tile(h)
    tile_w = _pick_tile(w)
    n_spatial = (h // tile_h) * (w // tile_w)
    bsz = _pick_batch_block(n, tile_h, tile_w, n_spatial)

    d8 = _dct8_matrix()
    dh = np.kron(np.eye(tile_h // 8, dtype=np.float32), d8)
    dw = np.kron(np.eye(tile_w // 8, dtype=np.float32), d8)
    dh_bf = jnp.asarray(dh, dtype=jnp.bfloat16)
    dht_bf = jnp.asarray(np.ascontiguousarray(dh.T), dtype=jnp.bfloat16)
    dw_bf = jnp.asarray(dw, dtype=jnp.bfloat16)
    dwt_bf = jnp.asarray(np.ascontiguousarray(dw.T), dtype=jnp.bfloat16)

    q_luma = _scaled_qtable(_LUMA_QTABLE, quality)
    q_chroma = _scaled_qtable(_CHROMA_QTABLE, quality)
    q_tile = np.stack([
        np.tile(q_luma, (tile_h // 8, tile_w // 8)),
        np.tile(q_chroma, (tile_h // 8, tile_w // 8)),
        np.tile(q_chroma, (tile_h // 8, tile_w // 8)),
    ], axis=0).astype(np.float32)                      # (3, TILE_H, TILE_W)
    qinv_tile = (1.0 / q_tile).astype(np.float32)

    # ---- real VMEM accounting (v7x has 64 MiB physical) --------------------
    blk = bsz * 3 * tile_h * tile_w * 4                # one f32 block slab
    const_bytes = ((2 * tile_h * tile_h + 2 * tile_w * tile_w) * 2   # bf16 DCT
                   + 2 * 3 * tile_h * tile_w * 4)                    # q/qinv
    vmem_need = 4 * blk + 2 * const_bytes + 7 * blk    # in/out dbl-buf + live
    vmem_limit = int(min(56 * 1024 * 1024,
                         max(32 * 1024 * 1024, int(vmem_need * 1.5))))

    # 4 block-diagonal matmuls per block (2 column, 2 row passes).
    flops = 12 * n * h * w * (tile_h + tile_w)
    bytes_accessed = 2 * n * 3 * h * w * 4 + 2 * const_bytes

    grid = (n // bsz, h // tile_h, w // tile_w)

    kernel = pl.pallas_call(
        _jpeg_kernel,
        out_shape=jax.ShapeDtypeStruct((n, 3, h, w), x.dtype),
        grid_spec=pltpu.PrefetchScalarGridSpec(
            num_scalar_prefetch=0,
            grid=grid,
            in_specs=[
                pl.BlockSpec((bsz, 3, tile_h, tile_w),
                             lambda nb, hs, ws: (nb, 0, hs, ws)),
                pl.BlockSpec((tile_h, tile_h), lambda nb, hs, ws: (0, 0)),
                pl.BlockSpec((tile_h, tile_h), lambda nb, hs, ws: (0, 0)),
                pl.BlockSpec((tile_w, tile_w), lambda nb, hs, ws: (0, 0)),
                pl.BlockSpec((tile_w, tile_w), lambda nb, hs, ws: (0, 0)),
                pl.BlockSpec((3, tile_h, tile_w), lambda nb, hs, ws: (0, 0, 0)),
                pl.BlockSpec((3, tile_h, tile_w), lambda nb, hs, ws: (0, 0, 0)),
            ],
            out_specs=pl.BlockSpec((bsz, 3, tile_h, tile_w),
                                   lambda nb, hs, ws: (nb, 0, hs, ws)),
        ),
        compiler_params=pltpu.CompilerParams(
            dimension_semantics=("parallel", "parallel", "parallel"),
            vmem_limit_bytes=vmem_limit,
        ),
        cost_estimate=pl.CostEstimate(
            flops=int(flops), transcendentals=0,
            bytes_accessed=int(bytes_accessed)),
    )
    return kernel(x, dh_bf, dht_bf, dw_bf, dwt_bf,
                  jnp.asarray(q_tile), jnp.asarray(qinv_tile))


def jpeg_forward(noised_and_cover, quality=50):
    """Mirrors JPEG.forward: replaces element 0 of the list."""
    noised_and_cover = list(noised_and_cover)
    noised_and_cover[0] = jpeg_noise(noised_and_cover[0], quality=quality)
    return noised_and_cover


if __name__ == "__main__":
    key = jax.random.PRNGKey(0)
    k1, k2 = jax.random.split(key)
    noised = jax.random.uniform(k1, (2, 3, 16, 16), jnp.float32,
                                minval=-1.0, maxval=1.0)
    cover = jax.random.uniform(k2, (2, 3, 16, 16), jnp.float32,
                               minval=-1.0, maxval=1.0)
    out = jpeg_forward([noised, cover], quality=50)
    jax.block_until_ready(out[0])
    assert out[0].shape == (2, 3, 16, 16)
    assert bool(jnp.all(jnp.isfinite(out[0])))
    assert bool(jnp.all(jnp.abs(out[0]) <= 1.0 + 1e-5))
    print("KERNEL_OK")
</pallas_src>

<mosaic_0001>
module attributes {stable_mosaic.version = 11 : i64} {
  func.func @_jpeg_kernel(%arg0: i32, %arg1: i32, %arg2: i32, %arg3: memref<1x3x16x16xf32, #tpu.memory_space<vmem>>, %arg4: memref<16x16xbf16, #tpu.memory_space<vmem>>, %arg5: memref<16x16xbf16, #tpu.memory_space<vmem>>, %arg6: memref<16x16xbf16, #tpu.memory_space<vmem>>, %arg7: memref<16x16xbf16, #tpu.memory_space<vmem>>, %arg8: memref<3x16x16xf32, #tpu.memory_space<vmem>>, %arg9: memref<3x16x16xf32, #tpu.memory_space<vmem>>, %arg10: memref<1x3x16x16xf32, #tpu.memory_space<vmem>>) attributes {dimension_semantics = [#tpu.dimension_semantics<parallel>, #tpu.dimension_semantics<parallel>, #tpu.dimension_semantics<parallel>], iteration_bounds = array<i64: 2, 1, 1>, scalar_prefetch = 0 : i64, scratch_operands = 0 : i64, tpu.core_type = #tpu.core_type<tc>, window_params = [{transform_indices = @transform_0, window_bounds = array<i64: 1, 3, 16, 16>}, {pipeline_mode = #tpu.pipeline_mode<synchronous>, transform_indices = @transform_1, window_bounds = array<i64: 16, 16>}, {pipeline_mode = #tpu.pipeline_mode<synchronous>, transform_indices = @transform_2, window_bounds = array<i64: 16, 16>}, {pipeline_mode = #tpu.pipeline_mode<synchronous>, transform_indices = @transform_3, window_bounds = array<i64: 16, 16>}, {pipeline_mode = #tpu.pipeline_mode<synchronous>, transform_indices = @transform_4, window_bounds = array<i64: 16, 16>}, {pipeline_mode = #tpu.pipeline_mode<synchronous>, transform_indices = @transform_5, window_bounds = array<i64: 3, 16, 16>}, {pipeline_mode = #tpu.pipeline_mode<synchronous>, transform_indices = @transform_6, window_bounds = array<i64: 3, 16, 16>}, {transform_indices = @transform_7, window_bounds = array<i64: 1, 3, 16, 16>}]} {
    %c0 = arith.constant 0 : index
    %c0_0 = arith.constant 0 : index
    %c0_1 = arith.constant 0 : index
    %c0_2 = arith.constant 0 : index
    %0 = vector.load %arg3[%c0, %c0_0, %c0_1, %c0_2] : memref<1x3x16x16xf32, #tpu.memory_space<vmem>>, vector<1x3x16x16xf32>
    %cst = arith.constant 1.275000e+02 : f32
    %1 = vector.broadcast %cst : f32 to vector<1x3x16x16xf32>
    %2 = arith.mulf %0, %1 : vector<1x3x16x16xf32>
    %cst_3 = arith.constant 1.275000e+02 : f32
    %3 = vector.broadcast %cst_3 : f32 to vector<1x3x16x16xf32>
    %4 = arith.addf %2, %3 : vector<1x3x16x16xf32>
    %cst_4 = arith.constant 0.000000e+00 : f32
    %cst_5 = arith.constant 2.550000e+02 : f32
    %5 = vector.broadcast %cst_4 : f32 to vector<1x3x16x16xf32>
    %6 = arith.maximumf %5, %4 : vector<1x3x16x16xf32>
    %7 = vector.broadcast %cst_5 : f32 to vector<1x3x16x16xf32>
    %8 = arith.minimumf %7, %6 : vector<1x3x16x16xf32>
    %9 = math.floor %8 : vector<1x3x16x16xf32>
    %10 = vector.extract_strided_slice %9 {offsets = [0, 0, 0, 0], sizes = [1, 1, 16, 16], strides = [1, 1, 1, 1]} : vector<1x3x16x16xf32> to vector<1x1x16x16xf32>
    %11 = vector.shape_cast %10 : vector<1x1x16x16xf32> to vector<1x16x16xf32>
    %12 = vector.extract_strided_slice %9 {offsets = [0, 1, 0, 0], sizes = [1, 1, 16, 16], strides = [1, 1, 1, 1]} : vector<1x3x16x16xf32> to vector<1x1x16x16xf32>
    %13 = vector.shape_cast %12 : vector<1x1x16x16xf32> to vector<1x16x16xf32>
    %14 = vector.extract_strided_slice %9 {offsets = [0, 2, 0, 0], sizes = [1, 1, 16, 16], strides = [1, 1, 1, 1]} : vector<1x3x16x16xf32> to vector<1x1x16x16xf32>
    %15 = vector.shape_cast %14 : vector<1x1x16x16xf32> to vector<1x16x16xf32>
    %cst_6 = arith.constant 2.990000e-01 : f32
    %16 = vector.broadcast %cst_6 : f32 to vector<1x16x16xf32>
    %17 = arith.mulf %16, %11 : vector<1x16x16xf32>
    %cst_7 = arith.constant 5.870000e-01 : f32
    %18 = vector.broadcast %cst_7 : f32 to vector<1x16x16xf32>
    %19 = arith.mulf %18, %13 : vector<1x16x16xf32>
    %20 = arith.addf %17, %19 : vector<1x16x16xf32>
    %cst_8 = arith.constant 1.140000e-01 : f32
    %21 = vector.broadcast %cst_8 : f32 to vector<1x16x16xf32>
    %22 = arith.mulf %21, %15 : vector<1x16x16xf32>
    %23 = arith.addf %20, %22 : vector<1x16x16xf32>
    %cst_9 = arith.constant 1.280000e+02 : f32
    %24 = vector.broadcast %cst_9 : f32 to vector<1x16x16xf32>
    %25 = arith.subf %23, %24 : vector<1x16x16xf32>
    %cst_10 = arith.constant -1.687360e-01 : f32
    %26 = vector.broadcast %cst_10 : f32 to vector<1x16x16xf32>
    %27 = arith.mulf %26, %11 : vector<1x16x16xf32>
    %cst_11 = arith.constant 3.312640e-01 : f32
    %28 = vector.broadcast %cst_11 : f32 to vector<1x16x16xf32>
    %29 = arith.mulf %28, %13 : vector<1x16x16xf32>
    %30 = arith.subf %27, %29 : vector<1x16x16xf32>
    %cst_12 = arith.constant 5.000000e-01 : f32
    %31 = vector.broadcast %cst_12 : f32 to vector<1x16x16xf32>
    %32 = arith.mulf %31, %15 : vector<1x16x16xf32>
    %33 = arith.addf %30, %32 : vector<1x16x16xf32>
    %cst_13 = arith.constant 5.000000e-01 : f32
    %34 = vector.broadcast %cst_13 : f32 to vector<1x16x16xf32>
    %35 = arith.mulf %34, %11 : vector<1x16x16xf32>
    %cst_14 = arith.constant 4.186880e-01 : f32
    %36 = vector.broadcast %cst_14 : f32 to vector<1x16x16xf32>
    %37 = arith.mulf %36, %13 : vector<1x16x16xf32>
    %38 = arith.subf %35, %37 : vector<1x16x16xf32>
    %cst_15 = arith.constant 8.131200e-02 : f32
    %39 = vector.broadcast %cst_15 : f32 to vector<1x16x16xf32>
    %40 = arith.mulf %39, %15 : vector<1x16x16xf32>
    %41 = arith.subf %38, %40 : vector<1x16x16xf32>
    %42 = vector.shape_cast %25 : vector<1x16x16xf32> to vector<1x1x16x16xf32>
    %43 = vector.shape_cast %33 : vector<1x16x16xf32> to vector<1x1x16x16xf32>
    %44 = vector.shape_cast %41 : vector<1x16x16xf32> to vector<1x1x16x16xf32>
    %45 = tpu.concatenate %42, %43, %44 in 1 : vector<1x1x16x16xf32>, vector<1x1x16x16xf32>, vector<1x1x16x16xf32> -> vector<1x3x16x16xf32>
    %c0_16 = arith.constant 0 : index
    %c0_17 = arith.constant 0 : index
    %46 = vector.load %arg4[%c0_16, %c0_17] : memref<16x16xbf16, #tpu.memory_space<vmem>>, vector<16x16xbf16>
    %47 = vector.shape_cast %46 : vector<16x16xbf16> to vector<1x16x16xbf16>
    %48 = vector.broadcast %47 : vector<1x16x16xbf16> to vector<3x16x16xbf16>
    %c0_18 = arith.constant 0 : index
    %c0_19 = arith.constant 0 : index
    %49 = vector.load %arg5[%c0_18, %c0_19] : memref<16x16xbf16, #tpu.memory_space<vmem>>, vector<16x16xbf16>
    %50 = vector.shape_cast %49 : vector<16x16xbf16> to vector<1x16x16xbf16>
    %51 = vector.broadcast %50 : vector<1x16x16xbf16> to vector<3x16x16xbf16>
    %c0_20 = arith.constant 0 : index
    %c0_21 = arith.constant 0 : index
    %52 = vector.load %arg6[%c0_20, %c0_21] : memref<16x16xbf16, #tpu.memory_space<vmem>>, vector<16x16xbf16>
    %c0_22 = arith.constant 0 : index
    %c0_23 = arith.constant 0 : index
    %53 = vector.load %arg7[%c0_22, %c0_23] : memref<16x16xbf16, #tpu.memory_space<vmem>>, vector<16x16xbf16>
    %54 = vector.shape_cast %45 : vector<1x3x16x16xf32> to vector<48x16xf32>
    %55 = arith.truncf %54 : vector<48x16xf32> to vector<48x16xbf16>
    %cst_24 = arith.constant dense<0.000000e+00> : vector<48x16xf32>
    %56 = tpu.matmul %55, %53, %cst_24 {dimension_numbers = #tpu.dot_dimension_numbers<[1], [0], [0], [1], [0, 0, 1, 1], [], []>} : vector<48x16xbf16>, vector<16x16xbf16>, vector<48x16xf32> -> vector<48x16xf32>
    %57 = vector.shape_cast %56 : vector<48x16xf32> to vector<3x16x16xf32>
    %58 = arith.truncf %57 : vector<3x16x16xf32> to vector<3x16x16xbf16>
    "tpu.trace_start"() <{level = 10 : i32, message = "bhk,bkw->bhw"}> : () -> ()
    %cst_25 = arith.constant dense<0.000000e+00> : vector<3x16x16xf32>
    %59 = tpu.matmul %48, %58, %cst_25 {dimension_numbers = #tpu.dot_dimension_numbers<[2], [1], [1], [2], [0, 0, 0, 1, 1, 2], [0], [0]>} : vector<3x16x16xbf16>, vector<3x16x16xbf16>, vector<3x16x16xf32> -> vector<3x16x16xf32>
    "tpu.trace_stop"() : () -> ()
    %60 = vector.shape_cast %59 : vector<3x16x16xf32> to vector<1x3x16x16xf32>
    %c0_26 = arith.constant 0 : index
    %c0_27 = arith.constant 0 : index
    %c0_28 = arith.constant 0 : index
    %61 = vector.load %arg9[%c0_26, %c0_27, %c0_28] : memref<3x16x16xf32, #tpu.memory_space<vmem>>, vector<3x16x16xf32>
    %62 = vector.shape_cast %61 : vector<3x16x16xf32> to vector<1x3x16x16xf32>
    %63 = arith.mulf %60, %62 : vector<1x3x16x16xf32>
    %cst_29 = arith.constant 5.000000e-01 : f32
    %64 = vector.broadcast %cst_29 : f32 to vector<1x3x16x16xf32>
    %65 = arith.addf %63, %64 : vector<1x3x16x16xf32>
    %66 = math.floor %65 : vector<1x3x16x16xf32>
    %c0_30 = arith.constant 0 : index
    %c0_31 = arith.constant 0 : index
    %c0_32 = arith.constant 0 : index
    %67 = vector.load %arg8[%c0_30, %c0_31, %c0_32] : memref<3x16x16xf32, #tpu.memory_space<vmem>>, vector<3x16x16xf32>
    %68 = vector.shape_cast %67 : vector<3x16x16xf32> to vector<1x3x16x16xf32>
    %69 = arith.mulf %66, %68 : vector<1x3x16x16xf32>
    %70 = vector.shape_cast %69 : vector<1x3x16x16xf32> to vector<3x16x16xf32>
    %71 = arith.truncf %70 : vector<3x16x16xf32> to vector<3x16x16xbf16>
    "tpu.trace_start"() <{level = 10 : i32, message = "bhk,bkw->bhw"}> : () -> ()
    %cst_33 = arith.constant dense<0.000000e+00> : vector<3x16x16xf32>
    %72 = tpu.matmul %51, %71, %cst_33 {dimension_numbers = #tpu.dot_dimension_numbers<[2], [1], [1], [2], [0, 0, 0, 1, 1, 2], [0], [0]>} : vector<3x16x16xbf16>, vector<3x16x16xbf16>, vector<3x16x16xf32> -> vector<3x16x16xf32>
    "tpu.trace_stop"() : () -> ()
    %73 = vector.shape_cast %72 : vector<3x16x16xf32> to vector<48x16xf32>
    %74 = arith.truncf %73 : vector<48x16xf32> to vector<48x16xbf16>
    %cst_34 = arith.constant dense<0.000000e+00> : vector<48x16xf32>
    %75 = tpu.matmul %74, %52, %cst_34 {dimension_numbers = #tpu.dot_dimension_numbers<[1], [0], [0], [1], [0, 0, 1, 1], [], []>} : vector<48x16xbf16>, vector<16x16xbf16>, vector<48x16xf32> -> vector<48x16xf32>
    %76 = vector.shape_cast %75 : vector<48x16xf32> to vector<1x3x16x16xf32>
    %77 = vector.extract_strided_slice %76 {offsets = [0, 0, 0, 0], sizes = [1, 1, 16, 16], strides = [1, 1, 1, 1]} : vector<1x3x16x16xf32> to vector<1x1x16x16xf32>
    %78 = vector.shape_cast %77 : vector<1x1x16x16xf32> to vector<1x16x16xf32>
    %79 = vector.extract_strided_slice %76 {offsets = [0, 1, 0, 0], sizes = [1, 1, 16, 16], strides = [1, 1, 1, 1]} : vector<1x3x16x16xf32> to vector<1x1x16x16xf32>
    %80 = vector.shape_cast %79 : vector<1x1x16x16xf32> to vector<1x16x16xf32>
    %81 = vector.extract_strided_slice %76 {offsets = [0, 2, 0, 0], sizes = [1, 1, 16, 16], strides = [1, 1, 1, 1]} : vector<1x3x16x16xf32> to vector<1x1x16x16xf32>
    %82 = vector.shape_cast %81 : vector<1x1x16x16xf32> to vector<1x16x16xf32>
    %cst_35 = arith.constant 1.402000e+00 : f32
    %83 = vector.broadcast %cst_35 : f32 to vector<1x16x16xf32>
    %84 = arith.mulf %83, %82 : vector<1x16x16xf32>
    %85 = arith.addf %78, %84 : vector<1x16x16xf32>
    %cst_36 = arith.constant 1.280000e+02 : f32
    %86 = vector.broadcast %cst_36 : f32 to vector<1x16x16xf32>
    %87 = arith.addf %85, %86 : vector<1x16x16xf32>
    %cst_37 = arith.constant 3.441360e-01 : f32
    %88 = vector.broadcast %cst_37 : f32 to vector<1x16x16xf32>
    %89 = arith.mulf %88, %80 : vector<1x16x16xf32>
    %90 = arith.subf %78, %89 : vector<1x16x16xf32>
    %cst_38 = arith.constant 7.141360e-01 : f32
    %91 = vector.broadcast %cst_38 : f32 to vector<1x16x16xf32>
    %92 = arith.mulf %91, %82 : vector<1x16x16xf32>
    %93 = arith.subf %90, %92 : vector<1x16x16xf32>
    %cst_39 = arith.constant 1.280000e+02 : f32
    %94 = vector.broadcast %cst_39 : f32 to vector<1x16x16xf32>
    %95 = arith.addf %93, %94 : vector<1x16x16xf32>
    %cst_40 = arith.constant 1.772000e+00 : f32
    %96 = vector.broadcast %cst_40 : f32 to vector<1x16x16xf32>
    %97 = arith.mulf %96, %80 : vector<1x16x16xf32>
    %98 = arith.addf %78, %97 : vector<1x16x16xf32>
    %cst_41 = arith.constant 1.280000e+02 : f32
    %99 = vector.broadcast %cst_41 : f32 to vector<1x16x16xf32>
    %100 = arith.addf %98, %99 : vector<1x16x16xf32>
    %101 = vector.shape_cast %87 : vector<1x16x16xf32> to vector<1x1x16x16xf32>
    %102 = vector.shape_cast %95 : vector<1x16x16xf32> to vector<1x1x16x16xf32>
    %103 = vector.shape_cast %100 : vector<1x16x16xf32> to vector<1x1x16x16xf32>
    %104 = tpu.concatenate %101, %102, %103 in 1 : vector<1x1x16x16xf32>, vector<1x1x16x16xf32>, vector<1x1x16x16xf32> -> vector<1x3x16x16xf32>
    %cst_42 = arith.constant 5.000000e-01 : f32
    %105 = vector.broadcast %cst_42 : f32 to vector<1x3x16x16xf32>
    %106 = arith.addf %104, %105 : vector<1x3x16x16xf32>
    %107 = math.floor %106 : vector<1x3x16x16xf32>
    %cst_43 = arith.constant 0.000000e+00 : f32
    %cst_44 = arith.constant 2.550000e+02 : f32
    %108 = vector.broadcast %cst_43 : f32 to vector<1x3x16x16xf32>
    %109 = arith.maximumf %108, %107 : vector<1x3x16x16xf32>
    %110 = vector.broadcast %cst_44 : f32 to vector<1x3x16x16xf32>
    %111 = arith.minimumf %110, %109 : vector<1x3x16x16xf32>
    %cst_45 = arith.constant 0.00784313772 : f32
    %112 = vector.broadcast %cst_45 : f32 to vector<1x3x16x16xf32>
    %113 = arith.mulf %111, %112 : vector<1x3x16x16xf32>
    %cst_46 = arith.constant 1.000000e+00 : f32
    %114 = vector.broadcast %cst_46 : f32 to vector<1x3x16x16xf32>
    %115 = arith.subf %113, %114 : vector<1x3x16x16xf32>
    %c0_47 = arith.constant 0 : index
    %c0_48 = arith.constant 0 : index
    %c0_49 = arith.constant 0 : index
    %c0_50 = arith.constant 0 : index
    %116 = vector.load %arg10[%c0_47, %c0_48, %c0_49, %c0_50] : memref<1x3x16x16xf32, #tpu.memory_space<vmem>>, vector<1x3x16x16xf32>
    tpu.vector_store %arg10[%c0_47, %c0_48, %c0_49, %c0_50], %115 {strides = array<i32>} : memref<1x3x16x16xf32, #tpu.memory_space<vmem>>, vector<1x3x16x16xf32>,
    return
  }
  func.func @transform_0(%arg0: i32, %arg1: i32, %arg2: i32) -> (i32, i32, i32, i32) {
    %c0_i32 = arith.constant 0 : i32
    %c0_i32_0 = arith.constant 0 : i32
    return %arg0, %c0_i32, %arg1, %arg2 : i32, i32, i32, i32
  }
  func.func @transform_1(%arg0: i32, %arg1: i32, %arg2: i32) -> (i32, i32) {
    %c0_i32 = arith.constant 0 : i32
    %c0_i32_0 = arith.constant 0 : i32
    %c0_i32_1 = arith.constant 0 : i32
    return %c0_i32, %c0_i32_0 : i32, i32
  }
  func.func @transform_2(%arg0: i32, %arg1: i32, %arg2: i32) -> (i32, i32) {
    %c0_i32 = arith.constant 0 : i32
    %c0_i32_0 = arith.constant 0 : i32
    %c0_i32_1 = arith.constant 0 : i32
    return %c0_i32, %c0_i32_0 : i32, i32
  }
  func.func @transform_3(%arg0: i32, %arg1: i32, %arg2: i32) -> (i32, i32) {
    %c0_i32 = arith.constant 0 : i32
    %c0_i32_0 = arith.constant 0 : i32
    %c0_i32_1 = arith.constant 0 : i32
    return %c0_i32, %c0_i32_0 : i32, i32
  }
  func.func @transform_4(%arg0: i32, %arg1: i32, %arg2: i32) -> (i32, i32) {
    %c0_i32 = arith.constant 0 : i32
    %c0_i32_0 = arith.constant 0 : i32
    %c0_i32_1 = arith.constant 0 : i32
    return %c0_i32, %c0_i32_0 : i32, i32
  }
  func.func @transform_5(%arg0: i32, %arg1: i32, %arg2: i32) -> (i32, i32, i32) {
    %c0_i32 = arith.constant 0 : i32
    %c0_i32_0 = arith.constant 0 : i32
    %c0_i32_1 = arith.constant 0 : i32
    %c0_i32_2 = arith.constant 0 : i32
    return %c0_i32, %c0_i32_0, %c0_i32_1 : i32, i32, i32
  }
  func.func @transform_6(%arg0: i32, %arg1: i32, %arg2: i32) -> (i32, i32, i32) {
    %c0_i32 = arith.constant 0 : i32
    %c0_i32_0 = arith.constant 0 : i32
    %c0_i32_1 = arith.constant 0 : i32
    %c0_i32_2 = arith.constant 0 : i32
    return %c0_i32, %c0_i32_0, %c0_i32_1 : i32, i32, i32
  }
  func.func @transform_7(%arg0: i32, %arg1: i32, %arg2: i32) -> (i32, i32, i32, i32) {
    %c0_i32 = arith.constant 0 : i32
    %c0_i32_0 = arith.constant 0 : i32
    return %arg0, %c0_i32, %arg1, %arg2 : i32, i32, i32, i32
  }
}

</mosaic_0001>

<llo_original>
// kernel: tpu_custom_call.1
$region0: #{tpu_custom_call.1}
  #allocation0 [shape = 'u32[]', space=smem, size = 0x4, offset = 0x4, fixed_abs, tag = 'smem constant byte address 0x4 - core index']
  #allocation1 [shape = 'u32[72,128]{1,0:T(1,128)}', space=vmem, size = 0x9000, scoped, tag = 'internal scratch']
  %s0 = inlined_call_operand.hbm [shape: f32[2,3,16,16], index: 0, kind: input, shape index: {}]
  %s1 = inlined_call_operand.hbm [shape: bf16[16,16], index: 1, kind: input, shape index: {}]
  %s2 = inlined_call_operand.hbm [shape: bf16[16,16], index: 2, kind: input, shape index: {}]
  %s3 = inlined_call_operand.hbm [shape: bf16[16,16], index: 3, kind: input, shape index: {}]
  %s4 = inlined_call_operand.hbm [shape: bf16[16,16], index: 4, kind: input, shape index: {}]
  %s5 = inlined_call_operand.hbm [shape: f32[3,16,16], index: 5, kind: input, shape index: {}]
  %s6 = inlined_call_operand.hbm [shape: f32[3,16,16], index: 6, kind: input, shape index: {}]
  %s7 = inlined_call_operand.hbm [shape: f32[2,3,16,16], index: 7, kind: output, shape index: {}]
  %s8 = sld [smem:[#allocation0]]
  $region89: #{tpu_custom_call.1} parent=0
    _
  %s10 = ssub.s32 1, %s8
  %s11 = scalar_select 0, %s10, %s8
  $region1: #{tpu_custom_call.1} parent=0
    #allocation2 [shape = 'u8[49152]{0}', space=vmem, size = 0xc000, scoped, tag = 'input window, operand 0']
    #allocation3 [shape = 's32[2]{0}', space=sflag, size = 0x8, scoped, tag = 'scoped memory for tpu_custom_call.1']
    #allocation4 [shape = 's32[2]{0}', space=sflag, size = 0x8, scoped, tag = 'scoped memory for tpu_custom_call.1']
    #allocation5 [shape = 'u8[4096]{0}', space=vmem, size = 0x1000, scoped, tag = 'input window, operand 1, single buffered']
    #allocation6 [shape = 's32[1]{0}', space=sflag, size = 0x4, scoped, tag = 'scoped memory for tpu_custom_call.1']
    #allocation7 [shape = 'u8[4096]{0}', space=vmem, size = 0x1000, scoped, tag = 'input window, operand 2, single buffered']
    #allocation8 [shape = 'u8[4096]{0}', space=vmem, size = 0x1000, scoped, tag = 'input window, operand 3, single buffered']
    #allocation9 [shape = 's32[1]{0}', space=sflag, size = 0x4, scoped, tag = 'scoped memory for tpu_custom_call.1']
    #allocation10 [shape = 'u8[4096]{0}', space=vmem, size = 0x1000, scoped, tag = 'input window, operand 4, single buffered']
    #allocation11 [shape = 'u8[24576]{0}', space=vmem, size = 0x6000, scoped, tag = 'input window, operand 5, single buffered']
    #allocation12 [shape = 's32[1]{0}', space=sflag, size = 0x4, scoped, tag = 'scoped memory for tpu_custom_call.1']
    #allocation13 [shape = 'u8[24576]{0}', space=vmem, size = 0x6000, scoped, tag = 'input window, operand 6, single buffered']
    #allocation14 [shape = 'u8[49152]{0}', space=vmem, size = 0xc000, scoped, tag = 'output window, operand 0']
    %12 = vsyncpa [#allocation3], 0
    %s13 = scalar_lea.sflag [#allocation3], 1
    %14 = vsyncpa %s13, 0
    %15 = vsyncpa [#allocation6], 0
    %16 = vsyncpa [#allocation9], 0
    %17 = vsyncpa [#allocation12], 0
    %18 = vsyncpa [#allocation4], 0
    %s19 = scalar_lea.sflag [#allocation4], 1
    %20 = vsyncpa %s19, 0
    loop: start=0, step=1, limit=4
    $region2: #{tpu_custom_call.1} parent=1 // loop_pre_header
      _
    $region3: #{tpu_custom_call.1} parent=1 // loop_header
      %s22 = sphi 0, %s26
      %p23 = scmp.ge.s32.totalorder %s22, 4
      %s29 = sphi 0, %s48
      %s30 = sphi 0, %s44
      %s31 = sphi 0, %s40
      %s32 = sphi 0, %s29
      %s33 = sphi 0, %s30
      %s34 = sphi 0, %s31
      %s35 = sphi 0, %s32
      %s36 = sphi 0, %s33
      %s37 = sphi 0, %s34
      %s55 = sphi 0, %s57
      %s58 = sphi 0, %s55
      %s59 = sphi 0, %s58
      %s75 = sphi 0, %s59
      %s79 = sphi 0, %s79
      %s81 = sphi 0, %s79
      %s82 = sphi 0, %s81
      %s96 = sphi 0, %s82
      %s100 = sphi 0, %s100
      %s102 = sphi 0, %s100
      %s103 = sphi 0, %s102
      %s117 = sphi 0, %s103
      %s121 = sphi 0, %s121
      %s123 = sphi 0, %s121
      %s124 = sphi 0, %s123
      %s138 = sphi 0, %s124
      %s142 = sphi 0, %s142
      %s144 = sphi 0, %s142
      %s145 = sphi 0, %s144
      %s159 = sphi 0, %s145
      %s163 = sphi 0, %s163
      %s165 = sphi 0, %s163
      %s166 = sphi 0, %s165
      %s180 = sphi 0, %s166
      %s184 = sphi 0, %s184
      %s186 = sphi 0, %s184
      %s187 = sphi 0, %s186
      %s201 = sphi 0, %s187
      %s211 = sphi 0, %s213
      %s214 = sphi 0, %s211
      %s215 = sphi 0, %s214
      %s231 = sphi 0, %s215
    $region4: #{tpu_custom_call.1} parent=1 // loop_header_branch
      %25 = sbr.rel (%p23) target = $region8
    $region5: #{tpu_custom_call.1} parent=1 // loop_body
      %s27 = ssub.s32 %s22, 1
      %s28 = ssub.s32 %s22, 2
      %s38 = sadd.s32 1, %s31
      %p39 = scmp.ge.s32.totalorder %s38, 1
      %s40 = scalar_select %p39, 0, %s38
      %s41 = sadd.s32 1, %s30
      %s42 = scalar_select %p39, %s41, %s30
      %p43 = scmp.ge.s32.totalorder %s42, 1
      %s44 = scalar_select %p43, 0, %s42
      %s45 = sadd.s32 1, %s29
      %s46 = scalar_select %p43, %s45, %s29
      %p47 = scmp.ge.s32.totalorder %s46, 2
      %s48 = scalar_select %p47, 0, %s46
      %s49 = ssub.s32 %s29, %s48
      %s50 = ssub.s32 %s30, %s44
      %s51 = sor.u32 %s49, %s50
      %s52 = ssub.s32 %s31, %s40
      %s53 = sor.u32 %s51, %s52
      %p54 = scmp.eq.s32.totalorder %s53, 0
      %s56 = sadd.s32 %s55, 1
      %s57 = scalar_select %p54, %s55, %s56
      %p60 = pneg %p54
      %p61 = scmp.eq.s32.totalorder %s22, 1
      %p62 = por %p60, %p61
      %p63 = scmp.ne.s32.totalorder %s55, %s58
      %p64 = scmp.eq.s32.totalorder %s22, 0
      %p65 = por %p63, %p64
      %p66 = scmp.ne.s32.totalorder %s55, %s58
      %p67 = scmp.eq.s32.totalorder %s27, 1
      %p68 = por %p66, %p67
      %p69 = scmp.ne.s32.totalorder %s58, %s59
      %p70 = scmp.eq.s32.totalorder %s27, 0
      %p71 = por %p69, %p70
      %p72 = scmp.ne.s32.totalorder %s58, %s59
      %p73 = scmp.eq.s32.totalorder %s28, 1
      %p74 = por %p72, %p73
      %p76 = scmp.ne.s32.totalorder %s59, %s75
      %p77 = scmp.eq.s32.totalorder %s28, 0
      %p78 = por %p76, %p77
      %s80 = sadd.s32 %s79, 1
      %p83 = scmp.eq.s32.totalorder %s22, 1
      %p84 = scmp.ne.s32.totalorder %s79, %s81
      %p85 = scmp.eq.s32.totalorder %s22, 0
      %p86 = por %p84, %p85
      %p87 = scmp.ne.s32.totalorder %s79, %s81
      %p88 = scmp.eq.s32.totalorder %s27, 1
      %p89 = por %p87, %p88
      %p90 = scmp.ne.s32.totalorder %s81, %s82
      %p91 = scmp.eq.s32.totalorder %s27, 0
      %p92 = por %p90, %p91
      %p93 = scmp.ne.s32.totalorder %s81, %s82
      %p94 = scmp.eq.s32.totalorder %s28, 1
      %p95 = por %p93, %p94
      %p97 = scmp.ne.s32.totalorder %s82, %s96
      %p98 = scmp.eq.s32.totalorder %s28, 0
      %p99 = por %p97, %p98
      %s101 = sadd.s32 %s100, 1
      %p104 = scmp.eq.s32.totalorder %s22, 1
      %p105 = scmp.ne.s32.totalorder %s100, %s102
      %p106 = scmp.eq.s32.totalorder %s22, 0
      %p107 = por %p105, %p106
      %p108 = scmp.ne.s32.totalorder %s100, %s102
      %p109 = scmp.eq.s32.totalorder %s27, 1
      %p110 = por %p108, %p109
      %p111 = scmp.ne.s32.totalorder %s102, %s103
      %p112 = scmp.eq.s32.totalorder %s27, 0
      %p113 = por %p111, %p112
      %p114 = scmp.ne.s32.totalorder %s102, %s103
      %p115 = scmp.eq.s32.totalorder %s28, 1
      %p116 = por %p114, %p115
      %p118 = scmp.ne.s32.totalorder %s103, %s117
      %p119 = scmp.eq.s32.totalorder %s28, 0
      %p120 = por %p118, %p119
      %s122 = sadd.s32 %s121, 1
      %p125 = scmp.eq.s32.totalorder %s22, 1
      %p126 = scmp.ne.s32.totalorder %s121, %s123
      %p127 = scmp.eq.s32.totalorder %s22, 0
      %p128 = por %p126, %p127
      %p129 = scmp.ne.s32.totalorder %s121, %s123
      %p130 = scmp.eq.s32.totalorder %s27, 1
      %p131 = por %p129, %p130
      %p132 = scmp.ne.s32.totalorder %s123, %s124
      %p133 = scmp.eq.s32.totalorder %s27, 0
      %p134 = por %p132, %p133
      %p135 = scmp.ne.s32.totalorder %s123, %s124
      %p136 = scmp.eq.s32.totalorder %s28, 1
      %p137 = por %p135, %p136
      %p139 = scmp.ne.s32.totalorder %s124, %s138
      %p140 = scmp.eq.s32.totalorder %s28, 0
      %p141 = por %p139, %p140
      %s143 = sadd.s32 %s142, 1
      %p146 = scmp.eq.s32.totalorder %s22, 1
      %p147 = scmp.ne.s32.totalorder %s142, %s144
      %p148 = scmp.eq.s32.totalorder %s22, 0
      %p149 = por %p147, %p148
      %p150 = scmp.ne.s32.totalorder %s142, %s144
      %p151 = scmp.eq.s32.totalorder %s27, 1
      %p152 = por %p150, %p151
      %p153 = scmp.ne.s32.totalorder %s144, %s145
      %p154 = scmp.eq.s32.totalorder %s27, 0
      %p155 = por %p153, %p154
      %p156 = scmp.ne.s32.totalorder %s144, %s145
      %p157 = scmp.eq.s32.totalorder %s28, 1
      %p158 = por %p156, %p157
      %p160 = scmp.ne.s32.totalorder %s145, %s159
      %p161 = scmp.eq.s32.totalorder %s28, 0
      %p162 = por %p160, %p161
      %s164 = sadd.s32 %s163, 1
      %p167 = scmp.eq.s32.totalorder %s22, 1
      %p168 = scmp.ne.s32.totalorder %s163, %s165
      %p169 = scmp.eq.s32.totalorder %s22, 0
      %p170 = por %p168, %p169
      %p171 = scmp.ne.s32.totalorder %s163, %s165
      %p172 = scmp.eq.s32.totalorder %s27, 1
      %p173 = por %p171, %p172
      %p174 = scmp.ne.s32.totalorder %s165, %s166
      %p175 = scmp.eq.s32.totalorder %s27, 0
      %p176 = por %p174, %p175
      %p177 = scmp.ne.s32.totalorder %s165, %s166
      %p178 = scmp.eq.s32.totalorder %s28, 1
      %p179 = por %p177, %p178
      %p181 = scmp.ne.s32.totalorder %s166, %s180
      %p182 = scmp.eq.s32.totalorder %s28, 0
      %p183 = por %p181, %p182
      %s185 = sadd.s32 %s184, 1
      %p188 = scmp.eq.s32.totalorder %s22, 1
      %p189 = scmp.ne.s32.totalorder %s184, %s186
      %p190 = scmp.eq.s32.totalorder %s22, 0
      %p191 = por %p189, %p190
      %p192 = scmp.ne.s32.totalorder %s184, %s186
      %p193 = scmp.eq.s32.totalorder %s27, 1
      %p194 = por %p192, %p193
      %p195 = scmp.ne.s32.totalorder %s186, %s187
      %p196 = scmp.eq.s32.totalorder %s27, 0
      %p197 = por %p195, %p196
      %p198 = scmp.ne.s32.totalorder %s186, %s187
      %p199 = scmp.eq.s32.totalorder %s28, 1
      %p200 = por %p198, %p199
      %p202 = scmp.ne.s32.totalorder %s187, %s201
      %p203 = scmp.eq.s32.totalorder %s28, 0
      %p204 = por %p202, %p203
      %s205 = ssub.s32 %s29, %s48
      %s206 = ssub.s32 %s30, %s44
      %s207 = sor.u32 %s205, %s206
      %s208 = ssub.s32 %s31, %s40
      %s209 = sor.u32 %s207, %s208
      %p210 = scmp.eq.s32.totalorder %s209, 0
      %s212 = sadd.s32 %s211, 1
      %s213 = scalar_select %p210, %s211, %s212
      %p216 = pneg %p210
      %p217 = scmp.eq.s32.totalorder %s22, 1
      %p218 = por %p216, %p217
      %p219 = scmp.ne.s32.totalorder %s211, %s214
      %p220 = scmp.eq.s32.totalorder %s22, 0
      %p221 = por %p219, %p220
      %p222 = scmp.ne.s32.totalorder %s211, %s214
      %p223 = scmp.eq.s32.totalorder %s27, 1
      %p224 = por %p222, %p223
      %p225 = scmp.ne.s32.totalorder %s214, %s215
      %p226 = scmp.eq.s32.totalorder %s27, 0
      %p227 = por %p225, %p226
      %p228 = scmp.ne.s32.totalorder %s214, %s215
      %p229 = scmp.eq.s32.totalorder %s28, 1
      %p230 = por %p228, %p229
      %p232 = scmp.ne.s32.totalorder %s215, %s231
      %p233 = scmp.eq.s32.totalorder %s28, 0
      %p234 = por %p232, %p233
      %p235 = scmp.le.s32.totalorder 1, %s22
      %p236 = scmp.lt.s32.totalorder %s22, 3
      %p237 = pnand %p235, %p236
      %p238 = pneg %p237
      // Predicated region
      $region9: #{tpu_custom_call.1} parent=5 // pred_check
        _
      $region10: #{tpu_custom_call.1} parent=5 // pred_check_branch
        %240 = sbr.rel (%p237) target = $region12
      $region11: #{tpu_custom_call.1} parent=5 // pred_region
        %s241 = ssub.s32 %s22, 1
        // Predicated region
        $region13: #{tpu_custom_call.1} parent=11 // pred_check
          %p242 = pneg %p92
        $region14: #{tpu_custom_call.1} parent=11 // pred_check_branch
          %244 = sbr.rel (%p242) target = $region16
        $region15: #{tpu_custom_call.1} parent=11 // pred_region
          %246 = vsyncadd [#allocation6], 0
          %s247 = sshll.u32 %s1, 4
          %s248 = int_to_ptr.hbm [resolvable:$true] %s247
          %s249 = sshll.u32 [#allocation5], 4
          %s250 = int_to_ptr.vmem [resolvable:$true] %s249
          %255 = dma.hbm_to_vmem [thread:$0]  %s248, 128, %s250, [#allocation6], 64, 64, 4
        $region16: #{tpu_custom_call.1} parent=11 // pred_fallthru
          _
        // Predicated region
        $region17: #{tpu_custom_call.1} parent=11 // pred_check
          %p256 = pneg %p113
        $region18: #{tpu_custom_call.1} parent=11 // pred_check_branch
          %258 = sbr.rel (%p256) target = $region20
        $region19: #{tpu_custom_call.1} parent=11 // pred_region
          %260 = vsyncadd [#allocation6], 0
          %s261 = sshll.u32 %s2, 4
          %s262 = int_to_ptr.hbm [resolvable:$true] %s261
          %s263 = sshll.u32 [#allocation7], 4
          %s264 = int_to_ptr.vmem [resolvable:$true] %s263
          %269 = dma.hbm_to_vmem [thread:$0]  %s262, 128, %s264, [#allocation6], 64, 64, 4
        $region20: #{tpu_custom_call.1} parent=11 // pred_fallthru
          _
        // Predicated region
        $region21: #{tpu_custom_call.1} parent=11 // pred_check
          %p270 = pneg %p134
        $region22: #{tpu_custom_call.1} parent=11 // pred_check_branch
          %272 = sbr.rel (%p270) target = $region24
        $region23: #{tpu_custom_call.1} parent=11 // pred_region
          %274 = vsyncadd [#allocation9], 0
          %s275 = sshll.u32 %s3, 4
          %s276 = int_to_ptr.hbm [resolvable:$true] %s275
          %s277 = sshll.u32 [#allocation8], 4
          %s278 = int_to_ptr.vmem [resolvable:$true] %s277
          %283 = dma.hbm_to_vmem [thread:$0]  %s276, 128, %s278, [#allocation9], 64, 64, 4
        $region24: #{tpu_custom_call.1} parent=11 // pred_fallthru
          _
        // Predicated region
        $region25: #{tpu_custom_call.1} parent=11 // pred_check
          %p284 = pneg %p155
        $region26: #{tpu_custom_call.1} parent=11 // pred_check_branch
          %286 = sbr.rel (%p284) target = $region28
        $region27: #{tpu_custom_call.1} parent=11 // pred_region
          %288 = vsyncadd [#allocation9], 0
          %s289 = sshll.u32 %s4, 4
          %s290 = int_to_ptr.hbm [resolvable:$true] %s289
          %s291 = sshll.u32 [#allocation10], 4
          %s292 = int_to_ptr.vmem [resolvable:$true] %s291
          %297 = dma.hbm_to_vmem [thread:$0]  %s290, 128, %s292, [#allocation9], 64, 64, 4
        $region28: #{tpu_custom_call.1} parent=11 // pred_fallthru
          _
        // Predicated region
        $region29: #{tpu_custom_call.1} parent=11 // pred_check
          %p298 = pneg %p176
        $region30: #{tpu_custom_call.1} parent=11 // pred_check_branch
          %300 = sbr.rel (%p298) target = $region32
        $region31: #{tpu_custom_call.1} parent=11 // pred_region
          %302 = vsyncadd [#allocation12], 0
          %s303 = sshll.u32 %s5, 4
          %s304 = int_to_ptr.hbm [resolvable:$true] %s303
          %s305 = sshll.u32 [#allocation11], 4
          %s306 = int_to_ptr.vmem [resolvable:$true] %s305
          %311 = dma.hbm_to_vmem [thread:$0]  %s304, 768, %s306, [#allocation12], 128, 128, 8
        $region32: #{tpu_custom_call.1} parent=11 // pred_fallthru
          _
        // Predicated region
        $region33: #{tpu_custom_call.1} parent=11 // pred_check
          %p312 = pneg %p197
        $region34: #{tpu_custom_call.1} parent=11 // pred_check_branch
          %314 = sbr.rel (%p312) target = $region36
        $region35: #{tpu_custom_call.1} parent=11 // pred_region
          %316 = vsyncadd [#allocation12], 0
          %s317 = sshll.u32 %s6, 4
          %s318 = int_to_ptr.hbm [resolvable:$true] %s317
          %s319 = sshll.u32 [#allocation13], 4
          %s320 = int_to_ptr.vmem [resolvable:$true] %s319
          %325 = dma.hbm_to_vmem [thread:$0]  %s318, 768, %s320, [#allocation12], 128, 128, 8
        $region36: #{tpu_custom_call.1} parent=11 // pred_fallthru
          _
      $region12: #{tpu_custom_call.1} parent=5 // pred_fallthru
        _
      %p326 = scmp.lt.s32.totalorder %s22, 2
      // Predicated region
      $region37: #{tpu_custom_call.1} parent=5 // pred_check
        %p327 = pneg %p326
      $region38: #{tpu_custom_call.1} parent=5 // pred_check_branch
        %329 = sbr.rel (%p327) target = $region40
      $region39: #{tpu_custom_call.1} parent=5 // pred_region
        // Predicated region
        $region41: #{tpu_custom_call.1} parent=39 // pred_check
          %p330 = pneg %p65
        $region42: #{tpu_custom_call.1} parent=39 // pred_check_branch
          %332 = sbr.rel (%p330) target = $region44
        $region43: #{tpu_custom_call.1} parent=39 // pred_region
          %s333 = sand.u32 %s55, 1
          %s334 = scalar_lea.sflag [#allocation3], %s333
          %s335 = sand.u32 %s55, 1
          %s336 = smul.addr %s335, 48
          %s337 = scalar_lea.vmem [#allocation2], %s336
          %s338 = smul.u32 2, %s30
          %340 = vsyncadd %s334, 0
          %s341 = sadd.s32 %s31, %s338
          %s342 = smul.addr %s29, 6
          %s343 = sadd.s32 %s341, %s342
          %s344 = smul.addr %s343, 8
          %s345 = scalar_lea.hbm %s0, %s344
          %s346 = sshll.u32 %s345, 4
          %s347 = int_to_ptr.hbm [resolvable:$true] %s346
          %s348 = sshll.u32 %s337, 4
          %s349 = int_to_ptr.vmem [resolvable:$true] %s348
          %354 = dma.hbm_to_vmem [thread:$0]  %s347, 768, %s349, %s334, 128, 128, 8
        $region44: #{tpu_custom_call.1} parent=39 // pred_fallthru
          _
      $region40: #{tpu_custom_call.1} parent=5 // pred_fallthru
        _
      %p355 = scmp.le.s32.totalorder 1, %s22
      %p356 = scmp.lt.s32.totalorder %s22, 3
      %p357 = pnand %p355, %p356
      %p358 = pneg %p357
      // Predicated region
      $region45: #{tpu_custom_call.1} parent=5 // pred_check
        _
      $region46: #{tpu_custom_call.1} parent=5 // pred_check_branch
        %360 = sbr.rel (%p357) target = $region48
      $region47: #{tpu_custom_call.1} parent=5 // pred_region
        %s361 = ssub.s32 %s22, 1
        %s362 = sand.u32 %s58, 1
        %s363 = scalar_lea.sflag [#allocation3], %s362
        %s364 = sand.u32 %s58, 1
        %s365 = smul.addr %s364, 48
        %s366 = scalar_lea.vmem [#allocation2], %s365
        // Predicated region
        $region49: #{tpu_custom_call.1} parent=47 // pred_check
          %p367 = pneg %p71
        $region50: #{tpu_custom_call.1} parent=47 // pred_check_branch
          %369 = sbr.rel (%p367) target = $region52
        $region51: #{tpu_custom_call.1} parent=47 // pred_region
          %371 = dma.done %s363, 768
        $region52: #{tpu_custom_call.1} parent=47 // pred_fallthru
          _
        // Predicated region
        $region53: #{tpu_custom_call.1} parent=47 // pred_check
          %p372 = pneg %p92
        $region54: #{tpu_custom_call.1} parent=47 // pred_check_branch
          %374 = sbr.rel (%p372) target = $region56
        $region55: #{tpu_custom_call.1} parent=47 // pred_region
          %376 = dma.done [#allocation6], 128
        $region56: #{tpu_custom_call.1} parent=47 // pred_fallthru
          _
        // Predicated region
        $region57: #{tpu_custom_call.1} parent=47 // pred_check
          %p377 = pneg %p113
        $region58: #{tpu_custom_call.1} parent=47 // pred_check_branch
          %379 = sbr.rel (%p377) target = $region60
        $region59: #{tpu_custom_call.1} parent=47 // pred_region
          %381 = dma.done [#allocation6], 128
        $region60: #{tpu_custom_call.1} parent=47 // pred_fallthru
          _
        // Predicated region
        $region61: #{tpu_custom_call.1} parent=47 // pred_check
          %p382 = pneg %p134
        $region62: #{tpu_custom_call.1} parent=47 // pred_check_branch
          %384 = sbr.rel (%p382) target = $region64
        $region63: #{tpu_custom_call.1} parent=47 // pred_region
          %386 = dma.done [#allocation9], 128
        $region64: #{tpu_custom_call.1} parent=47 // pred_fallthru
          _
        // Predicated region
        $region65: #{tpu_custom_call.1} parent=47 // pred_check
          %p387 = pneg %p155
        $region66: #{tpu_custom_call.1} parent=47 // pred_check_branch
          %389 = sbr.rel (%p387) target = $region68
        $region67: #{tpu_custom_call.1} parent=47 // pred_region
          %391 = dma.done [#allocation9], 128
        $region68: #{tpu_custom_call.1} parent=47 // pred_fallthru
          _
        // Predicated region
        $region69: #{tpu_custom_call.1} parent=47 // pred_check
          %p392 = pneg %p176
        $region70: #{tpu_custom_call.1} parent=47 // pred_check_branch
          %394 = sbr.rel (%p392) target = $region72
        $region71: #{tpu_custom_call.1} parent=47 // pred_region
          %396 = dma.done [#allocation12], 768
        $region72: #{tpu_custom_call.1} parent=47 // pred_fallthru
          _
        // Predicated region
        $region73: #{tpu_custom_call.1} parent=47 // pred_check
          %p397 = pneg %p197
        $region74: #{tpu_custom_call.1} parent=47 // pred_check_branch
          %399 = sbr.rel (%p397) target = $region76
        $region75: #{tpu_custom_call.1} parent=47 // pred_region
          %401 = dma.done [#allocation12], 768
        $region76: #{tpu_custom_call.1} parent=47 // pred_fallthru
          _
        %s402 = sand.u32 %s58, 1
        %s403 = scalar_lea.sflag [#allocation3], %s402
        %s404 = sand.u32 %s58, 1
        %s405 = smul.addr %s404, 48
        %s406 = scalar_lea.vmem [#allocation2], %s405
        %p407 = pneg %p71
        %p408 = pneg %p68
        %p409 = pneg %p92
        %p410 = pneg %p89
        %p411 = pneg %p113
        %p412 = pneg %p110
        %p413 = pneg %p134
        %p414 = pneg %p131
        %p415 = pneg %p155
        %p416 = pneg %p152
        %p417 = pneg %p176
        %p418 = pneg %p173
        %p419 = pneg %p197
        %p420 = pneg %p194
        %p421 = pneg %p227
        %p422 = pneg %p224
        %s423 = sand.u32 %s214, 1
        %s424 = scalar_lea.sflag [#allocation4], %s423
        %s425 = sand.u32 %s214, 1
        %s426 = smul.addr %s425, 48
        %s427 = scalar_lea.vmem [#allocation14], %s426
        %s428 = smul.u32 2, %s33
        %s429 = smul.u32 2, %s33
        %v431 = vld [vmem:[%s366] sm:$0xff]
        %v432 = vld [vmem:[%s366 + $0x8] sm:$0xff]
        %v433 = vld [vmem:[%s366 + $0x10] sm:$0xff]
        %v434 = vld [vmem:[%s366 + $0x18] sm:$0xff]
        %v435 = vld [vmem:[%s366 + $0x20] sm:$0xff]
        %v436 = vld [vmem:[%s366 + $0x28] sm:$0xff]
        %v437 = vmul.f32 %v431, 127.5
        %v438 = vmul.f32 %v432, 127.5
        %v439 = vmul.f32 %v433, 127.5
        %v440 = vmul.f32 %v434, 127.5
        %v441 = vmul.f32 %v435, 127.5
        %v442 = vmul.f32 %v436, 127.5
        %v443 = vadd.f32 %v437, 127.5
        %v444 = vadd.f32 %v438, 127.5
        %v445 = vadd.f32 %v439, 127.5
        %v446 = vadd.f32 %v440, 127.5
        %v447 = vadd.f32 %v441, 127.5
        %v448 = vadd.f32 %v442, 127.5
        %v449 = vmax.f32 %v443, 0.0
        %v450 = vmax.f32 %v444, 0.0
        %v451 = vmax.f32 %v445, 0.0
        %v452 = vmax.f32 %v446, 0.0
        %v453 = vmax.f32 %v447, 0.0
        %v454 = vmax.f32 %v448, 0.0
        %v455 = vmin.f32 %v449, 255.0
        %v456 = vmin.f32 %v450, 255.0
        %v457 = vmin.f32 %v451, 255.0
        %v458 = vmin.f32 %v452, 255.0
        %v459 = vmin.f32 %v453, 255.0
        %v460 = vmin.f32 %v454, 255.0
        %v461 = vfloor.f32 %v455
        %v462 = vfloor.f32 %v456
        %v463 = vfloor.f32 %v457
        %v464 = vfloor.f32 %v458
        %v465 = vfloor.f32 %v459
        %v466 = vfloor.f32 %v460
        %v467 = vmul.f32 %v461, 0.299
        %v468 = vmul.f32 %v462, 0.299
        %v469 = vmul.f32 %v463, 0.587
        %v470 = vmul.f32 %v464, 0.587
        %v471 = vadd.f32 %v467, %v469
        %v472 = vadd.f32 %v468, %v470
        %v473 = vmul.f32 %v465, 0.114
        %v474 = vmul.f32 %v466, 0.114
        %v475 = vadd.f32 %v471, %v473
        %v476 = vadd.f32 %v472, %v474
        %v477 = vsub.f32 %v475, 128.0
        %v478 = vsub.f32 %v476, 128.0
        %v479 = vmul.f32 %v461, -0.168736
        %v480 = vmul.f32 %v462, -0.168736
        %v481 = vmul.f32 %v463, 0.331264
        %v482 = vmul.f32 %v464, 0.331264
        %v483 = vsub.f32 %v479, %v481
        %v484 = vsub.f32 %v480, %v482
        %v485 = vmul.f32 %v465, 0.5
        %v486 = vmul.f32 %v466, 0.5
        %v487 = vadd.f32 %v483, %v485
        %v488 = vadd.f32 %v484, %v486
        %v489 = vmul.f32 %v461, 0.5
        %v490 = vmul.f32 %v462, 0.5
        %v491 = vmul.f32 %v463, 0.418688
        %v492 = vmul.f32 %v464, 0.418688
        %v493 = vsub.f32 %v489, %v491
        %v494 = vsub.f32 %v490, %v492
        %v495 = vmul.f32 %v465, 0.081312
        %v496 = vmul.f32 %v466, 0.081312
        %v497 = vsub.f32 %v493, %v495
        %v498 = vsub.f32 %v494, %v496
        %v499 = vld [vmem:[#allocation5] sm:$0xf]
        %v500 = vld [vmem:[#allocation5 + $0x4] sm:$0xf]
        %v501 = vld [vmem:[#allocation7] sm:$0xf]
        %v502 = vld [vmem:[#allocation7 + $0x4] sm:$0xf]
        %v503 = vld [vmem:[#allocation8] sm:$0xf]
        %v504 = vld [vmem:[#allocation8 + $0x4] sm:$0xf]
        %v505 = vld [vmem:[#allocation10] sm:$0xf]
        %v506 = vld [vmem:[#allocation10 + $0x4] sm:$0xf]
        %v507 = vpack.c.bf16 %v478, %v477
        %v508 = vpack.c.bf16 %v488, %v487
        %v509 = vpack.c.bf16 %v498, %v497
        %v512 = vunpack.c.l.b16 %v505
        %v513 = vunpack.c.l.b16 %v506
        %v514 = vpack.c.b16 %v513, %v512
        %vm516 = vcmask 130048
        %v518 = vsel %vm516, %v507, 0
        %v521 = vsel %vm516, %v508, 0
        %v524 = vsel %vm516, %v509, 0
        %526 = vmatpush.bf16.msra.mxu0 0
        %527 = vmatpush.bf16.msra.mxu0 0
        %528 = vmatpush.bf16.msra.mxu0 0
        %529 = vmatpush.bf16.msra.mxu0 0
        %530 = vmatpush.bf16.msra.mxu0 0
        %531 = vmatpush.bf16.msra.mxu0 0
        %532 = vmatpush.bf16.msra.mxu0 0
        %533 = vmatpush.bf16.msra.mxu0 %v514
        %534 = vmatmul.bf16.gmra.mxu0 %v518
        %v535 = vpop.f32.mrf.mxu0
        %v536 = vadd.f32 0.0, %v535
        %v537 = vpop.f32.mrf.mxu0
        %v538 = vadd.f32 0.0, %v537
        %539 = vmatmul.bf16.gmra.mxu0 %v521
        %v540 = vpop.f32.mrf.mxu0
        %v541 = vadd.f32 0.0, %v540
        %v542 = vpop.f32.mrf.mxu0
        %v543 = vadd.f32 0.0, %v542
        %544 = vmatmul.bf16.gmra.mxu0 %v524
        %v545 = vpop.f32.mrf.mxu0
        %v546 = vadd.f32 0.0, %v545
        %v547 = vpop.f32.mrf.mxu0
        %v548 = vadd.f32 0.0, %v547
        %549 = vdwg.mxu0
        %v550 = vpack.c.bf16 %v536, %v536
        %v551 = vpack.c.bf16 %v538, %v538
        %v552 = vpack.c.bf16 %v541, %v541
        %v553 = vpack.c.bf16 %v543, %v543
        %v554 = vpack.c.bf16 %v546, %v546
        %v555 = vpack.c.bf16 %v548, %v548
        %v558 = vunpack.c.l.b16 %v499
        %v559 = vunpack.c.l.b16 %v500
        %v560 = vpack.c.b16 %v559, %v558
        %v563 = vunpack.c.l.b16 %v550
        %v564 = vunpack.c.l.b16 %v551
        %v565 = vpack.c.b16 %v564, %v563
        %v568 = vsel %vm516, %v560, 0
        %570 = vmatpush.bf16.msra.mxu0 0
        %571 = vmatpush.bf16.msra.mxu0 0
        %572 = vmatpush.bf16.msra.mxu0 0
        %573 = vmatpush.bf16.msra.mxu0 0
        %574 = vmatpush.bf16.msra.mxu0 0
        %575 = vmatpush.bf16.msra.mxu0 0
        %576 = vmatpush.bf16.msra.mxu0 0
        %577 = vmatpush.bf16.msra.mxu0 %v565
        %578 = vmatmul.bf16.gmra.mxu0 %v568
        %v579 = vpop.f32.mrf.mxu0
        %v580 = vadd.f32 0.0, %v579
        %v581 = vpop.f32.mrf.mxu0
        %v582 = vadd.f32 0.0, %v581
        %583 = vdwg.mxu0
        %v586 = vunpack.c.l.b16 %v552
        %v587 = vunpack.c.l.b16 %v553
        %v588 = vpack.c.b16 %v587, %v586
        %590 = vmatpush.bf16.msra.mxu0 0
        %591 = vmatpush.bf16.msra.mxu0 0
        %592 = vmatpush.bf16.msra.mxu0 0
        %593 = vmatpush.bf16.msra.mxu0 0
        %594 = vmatpush.bf16.msra.mxu0 0
        %595 = vmatpush.bf16.msra.mxu0 0
        %596 = vmatpush.bf16.msra.mxu0 0
        %597 = vmatpush.bf16.msra.mxu0 %v588
        %598 = vmatmul.bf16.gmra.mxu0 %v568
        %v599 = vpop.f32.mrf.mxu0
        %v600 = vadd.f32 0.0, %v599
        %v601 = vpop.f32.mrf.mxu0
        %v602 = vadd.f32 0.0, %v601
        %603 = vdwg.mxu0
        %v606 = vunpack.c.l.b16 %v554
        %v607 = vunpack.c.l.b16 %v555
        %v608 = vpack.c.b16 %v607, %v606
        %610 = vmatpush.bf16.msra.mxu0 0
        %611 = vmatpush.bf16.msra.mxu0 0
        %612 = vmatpush.bf16.msra.mxu0 0
        %613 = vmatpush.bf16.msra.mxu0 0
        %614 = vmatpush.bf16.msra.mxu0 0
        %615 = vmatpush.bf16.msra.mxu0 0
        %616 = vmatpush.bf16.msra.mxu0 0
        %617 = vmatpush.bf16.msra.mxu0 %v608
        %618 = vmatmul.bf16.gmra.mxu0 %v568
        %v619 = vpop.f32.mrf.mxu0
        %v620 = vadd.f32 0.0, %v619
        %v621 = vpop.f32.mrf.mxu0
        %v622 = vadd.f32 0.0, %v621
        %623 = vdwg.mxu0
        %v624 = vld [vmem:[#allocation13] sm:$0xff]
        %v625 = vld [vmem:[#allocation13 + $0x8] sm:$0xff]
        %v626 = vld [vmem:[#allocation13 + $0x10] sm:$0xff]
        %v627 = vld [vmem:[#allocation13 + $0x18] sm:$0xff]
        %v628 = vld [vmem:[#allocation13 + $0x20] sm:$0xff]
        %v629 = vld [vmem:[#allocation13 + $0x28] sm:$0xff]
        %v630 = vmul.f32 %v580, %v624
        %v631 = vmul.f32 %v582, %v625
        %v632 = vmul.f32 %v600, %v626
        %v633 = vmul.f32 %v602, %v627
        %v634 = vmul.f32 %v620, %v628
        %v635 = vmul.f32 %v622, %v629
        %v636 = vadd.f32 %v630, 0.5
        %v637 = vadd.f32 %v631, 0.5
        %v638 = vadd.f32 %v632, 0.5
        %v639 = vadd.f32 %v633, 0.5
        %v640 = vadd.f32 %v634, 0.5
        %v641 = vadd.f32 %v635, 0.5
        %v642 = vfloor.f32 %v636
        %v643 = vfloor.f32 %v637
        %v644 = vfloor.f32 %v638
        %v645 = vfloor.f32 %v639
        %v646 = vfloor.f32 %v640
        %v647 = vfloor.f32 %v641
        %v648 = vld [vmem:[#allocation11] sm:$0xff]
        %v649 = vld [vmem:[#allocation11 + $0x8] sm:$0xff]
        %v650 = vld [vmem:[#allocation11 + $0x10] sm:$0xff]
        %v651 = vld [vmem:[#allocation11 + $0x18] sm:$0xff]
        %v652 = vld [vmem:[#allocation11 + $0x20] sm:$0xff]
        %v653 = vld [vmem:[#allocation11 + $0x28] sm:$0xff]
        %v654 = vmul.f32 %v642, %v648
        %v655 = vmul.f32 %v643, %v649
        %v656 = vmul.f32 %v644, %v650
        %v657 = vmul.f32 %v645, %v651
        %v658 = vmul.f32 %v646, %v652
        %v659 = vmul.f32 %v647, %v653
        %v660 = vpack.c.bf16 %v654, %v654
        %v661 = vpack.c.bf16 %v655, %v655
        %v662 = vpack.c.bf16 %v656, %v656
        %v663 = vpack.c.bf16 %v657, %v657
        %v664 = vpack.c.bf16 %v658, %v658
        %v665 = vpack.c.bf16 %v659, %v659
        %v668 = vunpack.c.l.b16 %v501
        %v669 = vunpack.c.l.b16 %v502
        %v670 = vpack.c.b16 %v669, %v668
        %v673 = vunpack.c.l.b16 %v660
        %v674 = vunpack.c.l.b16 %v661
        %v675 = vpack.c.b16 %v674, %v673
        %v678 = vsel %vm516, %v670, 0
        %680 = vmatpush.bf16.msra.mxu0 0
        %681 = vmatpush.bf16.msra.mxu0 0
        %682 = vmatpush.bf16.msra.mxu0 0
        %683 = vmatpush.bf16.msra.mxu0 0
        %684 = vmatpush.bf16.msra.mxu0 0
        %685 = vmatpush.bf16.msra.mxu0 0
        %686 = vmatpush.bf16.msra.mxu0 0
        %687 = vmatpush.bf16.msra.mxu0 %v675
        %688 = vmatmul.bf16.gmra.mxu0 %v678
        %v689 = vpop.f32.mrf.mxu0
        %v690 = vadd.f32 0.0, %v689
        %v691 = vpop.f32.mrf.mxu0
        %v692 = vadd.f32 0.0, %v691
        %693 = vdwg.mxu0
        %v696 = vunpack.c.l.b16 %v662
        %v697 = vunpack.c.l.b16 %v663
        %v698 = vpack.c.b16 %v697, %v696
        %700 = vmatpush.bf16.msra.mxu0 0
        %701 = vmatpush.bf16.msra.mxu0 0
        %702 = vmatpush.bf16.msra.mxu0 0
        %703 = vmatpush.bf16.msra.mxu0 0
        %704 = vmatpush.bf16.msra.mxu0 0
        %705 = vmatpush.bf16.msra.mxu0 0
        %706 = vmatpush.bf16.msra.mxu0 0
        %707 = vmatpush.bf16.msra.mxu0 %v698
        %708 = vmatmul.bf16.gmra.mxu0 %v678
        %v709 = vpop.f32.mrf.mxu0
        %v710 = vadd.f32 0.0, %v709
        %v711 = vpop.f32.mrf.mxu0
        %v712 = vadd.f32 0.0, %v711
        %713 = vdwg.mxu0
        %v716 = vunpack.c.l.b16 %v664
        %v717 = vunpack.c.l.b16 %v665
        %v718 = vpack.c.b16 %v717, %v716
        %720 = vmatpush.bf16.msra.mxu0 0
        %721 = vmatpush.bf16.msra.mxu0 0
        %722 = vmatpush.bf16.msra.mxu0 0
        %723 = vmatpush.bf16.msra.mxu0 0
        %724 = vmatpush.bf16.msra.mxu0 0
        %725 = vmatpush.bf16.msra.mxu0 0
        %726 = vmatpush.bf16.msra.mxu0 0
        %727 = vmatpush.bf16.msra.mxu0 %v718
        %728 = vmatmul.bf16.gmra.mxu0 %v678
        %v729 = vpop.f32.mrf.mxu0
        %v730 = vadd.f32 0.0, %v729
        %v731 = vpop.f32.mrf.mxu0
        %v732 = vadd.f32 0.0, %v731
        %733 = vdwg.mxu0
        %v734 = vpack.c.bf16 %v692, %v690
        %v735 = vpack.c.bf16 %v712, %v710
        %v736 = vpack.c.bf16 %v732, %v730
        %v739 = vunpack.c.l.b16 %v503
        %v740 = vunpack.c.l.b16 %v504
        %v741 = vpack.c.b16 %v740, %v739
        %v744 = vsel %vm516, %v734, 0
        %v747 = vsel %vm516, %v735, 0
        %v750 = vsel %vm516, %v736, 0
        %752 = vmatpush.bf16.msra.mxu0 0
        %753 = vmatpush.bf16.msra.mxu0 0
        %754 = vmatpush.bf16.msra.mxu0 0
        %755 = vmatpush.bf16.msra.mxu0 0
        %756 = vmatpush.bf16.msra.mxu0 0
        %757 = vmatpush.bf16.msra.mxu0 0
        %758 = vmatpush.bf16.msra.mxu0 0
        %759 = vmatpush.bf16.msra.mxu0 %v741
        %760 = vmatmul.bf16.gmra.mxu0 %v744
        %v761 = vpop.f32.mrf.mxu0
        %v762 = vadd.f32 0.0, %v761
        %v763 = vpop.f32.mrf.mxu0
        %v764 = vadd.f32 0.0, %v763
        %765 = vmatmul.bf16.gmra.mxu0 %v747
        %v766 = vpop.f32.mrf.mxu0
        %v767 = vadd.f32 0.0, %v766
        %v768 = vpop.f32.mrf.mxu0
        %v769 = vadd.f32 0.0, %v768
        %770 = vmatmul.bf16.gmra.mxu0 %v750
        %v771 = vpop.f32.mrf.mxu0
        %v772 = vadd.f32 0.0, %v771
        %v773 = vpop.f32.mrf.mxu0
        %v774 = vadd.f32 0.0, %v773
        %775 = vdwg.mxu0
        %v776 = vmul.f32 %v772, 1.402
        %v777 = vmul.f32 %v774, 1.402
        %v778 = vadd.f32 %v762, %v776
        %v779 = vadd.f32 %v764, %v777
        %v780 = vadd.f32 %v778, 128.0
        %v781 = vadd.f32 %v779, 128.0
        %v782 = vmul.f32 %v767, 0.344136
        %v783 = vmul.f32 %v769, 0.344136
        %v784 = vsub.f32 %v762, %v782
        %v785 = vsub.f32 %v764, %v783
        %v786 = vmul.f32 %v772, 0.714136
        %v787 = vmul.f32 %v774, 0.714136
        %v788 = vsub.f32 %v784, %v786
        %v789 = vsub.f32 %v785, %v787
        %v790 = vadd.f32 %v788, 128.0
        %v791 = vadd.f32 %v789, 128.0
        %v792 = vmul.f32 %v767, 1.772
        %v793 = vmul.f32 %v769, 1.772
        %v794 = vadd.f32 %v762, %v792
        %v795 = vadd.f32 %v764, %v793
        %v796 = vadd.f32 %v794, 128.0
        %v797 = vadd.f32 %v795, 128.0
        %v798 = vadd.f32 %v780, 0.5
        %v799 = vadd.f32 %v781, 0.5
        %v800 = vadd.f32 %v790, 0.5
        %v801 = vadd.f32 %v791, 0.5
        %v802 = vadd.f32 %v796, 0.5
        %v803 = vadd.f32 %v797, 0.5
        %v804 = vfloor.f32 %v798
        %v805 = vfloor.f32 %v799
        %v806 = vfloor.f32 %v800
        %v807 = vfloor.f32 %v801
        %v808 = vfloor.f32 %v802
        %v809 = vfloor.f32 %v803
        %v810 = vmax.f32 %v804, 0.0
        %v811 = vmax.f32 %v805, 0.0
        %v812 = vmax.f32 %v806, 0.0
        %v813 = vmax.f32 %v807, 0.0
        %v814 = vmax.f32 %v808, 0.0
        %v815 = vmax.f32 %v809, 0.0
        %v816 = vmin.f32 %v810, 255.0
        %v817 = vmin.f32 %v811, 255.0
        %v818 = vmin.f32 %v812, 255.0
        %v819 = vmin.f32 %v813, 255.0
        %v820 = vmin.f32 %v814, 255.0
        %v821 = vmin.f32 %v815, 255.0
        %v822 = vmul.f32 %v816, 0.007843138
        %v823 = vmul.f32 %v817, 0.007843138
        %v824 = vmul.f32 %v818, 0.007843138
        %v825 = vmul.f32 %v819, 0.007843138
        %v826 = vmul.f32 %v820, 0.007843138
        %v827 = vmul.f32 %v821, 0.007843138
        %v828 = vsub.f32 %v822, 1.0
        %v829 = vsub.f32 %v823, 1.0
        %v830 = vsub.f32 %v824, 1.0
        %v831 = vsub.f32 %v825, 1.0
        %v832 = vsub.f32 %v826, 1.0
        %v833 = vsub.f32 %v827, 1.0
        %834 = vst.msk [vmem:[%s427] sm:$0xff] %vm516, %v828
        %835 = vst.msk [vmem:[%s427 + $0x8] sm:$0xff] %vm516, %v829
        %836 = vst.msk [vmem:[%s427 + $0x10] sm:$0xff] %vm516, %v830
        %837 = vst.msk [vmem:[%s427 + $0x18] sm:$0xff] %vm516, %v831
        %838 = vst.msk [vmem:[%s427 + $0x20] sm:$0xff] %vm516, %v832
        %839 = vst.msk [vmem:[%s427 + $0x28] sm:$0xff] %vm516, %v833
        %s840 = sand.u32 %s214, 1
        %s841 = scalar_lea.sflag [#allocation4], %s840
        %s842 = sand.u32 %s214, 1
        %s843 = smul.addr %s842, 48
        %s844 = scalar_lea.vmem [#allocation14], %s843
        // Predicated region
        $region77: #{tpu_custom_call.1} parent=47 // pred_check
          %p845 = pneg %p224
        $region78: #{tpu_custom_call.1} parent=47 // pred_check_branch
          %847 = sbr.rel (%p845) target = $region80
        $region79: #{tpu_custom_call.1} parent=47 // pred_region
          %s848 = smul.u32 2, %s33
          %850 = vsyncadd %s841, 0
          %s851 = sadd.s32 %s34, %s848
          %s852 = smul.addr %s32, 6
          %s853 = sadd.s32 %s851, %s852
          %s854 = smul.addr %s853, 8
          %s855 = scalar_lea.hbm %s7, %s854
          %s856 = sshll.u32 %s844, 4
          %s857 = int_to_ptr.vmem [resolvable:$true] %s856
          %s858 = sshll.u32 %s855, 4
          %s859 = int_to_ptr.hbm [resolvable:$true] %s858
          %864 = dma.vmem_to_hbm [thread:$0]  %s857, 768, %s859, %s841, 128, 128, 8
        $region80: #{tpu_custom_call.1} parent=47 // pred_fallthru
          _
      $region48: #{tpu_custom_call.1} parent=5 // pred_fallthru
        _
      %p865 = scmp.le.s32.totalorder 2, %s22
      // Predicated region
      $region81: #{tpu_custom_call.1} parent=5 // pred_check
        %p866 = pneg %p865
      $region82: #{tpu_custom_call.1} parent=5 // pred_check_branch
        %868 = sbr.rel (%p866) target = $region84
      $region83: #{tpu_custom_call.1} parent=5 // pred_region
        %s869 = ssub.s32 %s22, 2
        // Predicated region
        $region85: #{tpu_custom_call.1} parent=83 // pred_check
          %p870 = pneg %p230
        $region86: #{tpu_custom_call.1} parent=83 // pred_check_branch
          %872 = sbr.rel (%p870) target = $region88
        $region87: #{tpu_custom_call.1} parent=83 // pred_region
          %s873 = sand.u32 %s215, 1
          %s874 = scalar_lea.sflag [#allocation4], %s873
          %s875 = sand.u32 %s215, 1
          %s876 = smul.addr %s875, 48
          %s877 = scalar_lea.vmem [#allocation14], %s876
          %879 = dma.done %s874, 768
        $region88: #{tpu_custom_call.1} parent=83 // pred_fallthru
          _
      $region84: #{tpu_custom_call.1} parent=5 // pred_fallthru
        _
    $region6: #{tpu_custom_call.1} parent=1 // loop_footer
      %s26 = sadd.s32 1, %s22
    $region7: #{tpu_custom_call.1} parent=1 // loop_footer_branch
      %21 = sbr.rel target = $region3
    $region8: #{tpu_custom_call.1} parent=1 // loop_exit
      _
    %880 = vsyncpa [#allocation3], 1
    %s881 = scalar_lea.sflag [#allocation3], 1
    %882 = vsyncpa %s881, 1
    %883 = vsyncpa [#allocation6], 1
    %884 = vsyncpa [#allocation9], 1
    %885 = vsyncpa [#allocation12], 1
    %886 = vsyncpa [#allocation4], 1
    %s887 = scalar_lea.sflag [#allocation4], 1
    %888 = vsyncpa %s887, 1

</llo_original>
